<compile_context>
chip_gen: v5e
topology: v5e:2x2
jax: 0.10.0
libtpu: 0.0.40
codegen_flags: <defaults>
</compile_context>

<pallas_src>
import functools

import jax
import jax.numpy as jnp
from jax import lax
from jax.experimental import pallas as pl
from jax.experimental.pallas import tpu as pltpu

FEATURE_DIMS = 5                      # F
N_AUG = 2
HIDDEN = 64                           # H
IN_DIM = FEATURE_DIMS + 1 + N_AUG     # 8
F_PAD = 8                             # F padded to one full sublane group
_LANE = 128


def _round_up(n, m):
    return ((n + m - 1) // m) * m


# ---------------------------------------------------------------------------
# Kernels (padded, transposed, lane-dense layout: batch N on the 128-lane axis)
# ---------------------------------------------------------------------------
def toy_ode_rhs_kernel(t_ref, x_ref, w1x_ref, w1t_ref, b1_ref, w2_ref, b2_ref, o_ref):
    """dx/dt for one (F_PAD, tn) tile.  x rows 5..7 are zero padding; W2/b2 padded rows are
    zero, so the output padding rows stay exactly 0."""
    t = t_ref[0]
    tb = t * w1t_ref[...] + b1_ref[...]                                          # (H, 1) folded once
    h = jnp.dot(w1x_ref[...], x_ref[...], preferred_element_type=jnp.float32)    # (H, tn)
    h = jnp.maximum(h + tb, 0.0)                                                 # ReLU
    o_ref[...] = jnp.dot(w2_ref[...], h, preferred_element_type=jnp.float32) + b2_ref[...]


def toy_ode_euler_kernel(n_steps, unroll,
                         ts_ref, x_ref, w1x_ref, w1t_ref, b1_ref, w2_ref, b2_ref, o_ref):
    """Fused explicit Euler: n_steps serially-dependent RHS evals in one pallas_call.
    All loop-invariant vector work is hoisted/folded so each step is only
    matmul -> ReLU -> matmul -> add on the serial dependence chain."""
    t0 = ts_ref[0]
    dt = ts_ref[1]
    w1x = w1x_ref[...]
    w2dt = dt * w2_ref[...]                      # fold dt into layer-2 weight/bias once
    b2dt = dt * b2_ref[...]
    tb_base = t0 * w1t_ref[...] + b1_ref[...]    # (H, 1)
    tb_step = dt * w1t_ref[...]                  # (H, 1)

    def body(i, xT):
        tb = tb_base + i.astype(jnp.float32) * tb_step
        h = jnp.dot(w1x, xT, preferred_element_type=jnp.float32)
        h = jnp.maximum(h + tb, 0.0)
        return xT + jnp.dot(w2dt, h, preferred_element_type=jnp.float32) + b2dt

    # Bounded unroll: steps are serially dependent, so full unroll adds no ILP — only code
    # size and register pressure.  Keep the loop visible to the LLO scheduler.
    o_ref[...] = lax.fori_loop(0, n_steps, body, x_ref[...], unroll=unroll)


# ---------------------------------------------------------------------------
# Grid / spec / layout plumbing
# ---------------------------------------------------------------------------
def _specs(n_run, tn):
    grid = (n_run // tn,)
    smem = pl.BlockSpec(memory_space=pltpu.MemorySpace.SMEM)          # scalar t / (t0, dt)
    x_spec = pl.BlockSpec((F_PAD, tn), lambda i: (0, i))
    # Weights: full-array blocks with constant index_map -> VMEM-resident across batch tiles.
    w_specs = [
        pl.BlockSpec((HIDDEN, F_PAD), lambda i: (0, 0)),              # w1x (zero-padded cols)
        pl.BlockSpec((HIDDEN, 1), lambda i: (0, 0)),                  # w1t
        pl.BlockSpec((HIDDEN, 1), lambda i: (0, 0)),                  # b1
        pl.BlockSpec((F_PAD, HIDDEN), lambda i: (0, 0)),              # w2 (zero-padded rows)
        pl.BlockSpec((F_PAD, 1), lambda i: (0, 0)),                   # b2 (zero-padded rows)
    ]
    out_spec = pl.BlockSpec((F_PAD, tn), lambda i: (0, i))
    return grid, [smem, x_spec, *w_specs], out_spec


def _pick_tn(n0, cap):
    """Largest lane-tile <= cap (multiple of 128).  Keep >= 2 grid tiles when possible so the
    'parallel' batch axis can shard across v7x's two TensorCores; on single-TC v5e/v6e the
    extra grid step costs ~0.35 us, i.e. nothing."""
    tn = min(cap, n0)
    if n0 >= 2 * _LANE:
        tn = min(tn, _round_up((n0 + 1) // 2, _LANE))
    return max(_LANE, tn)


def _prep(n, cap):
    n0 = _round_up(n, _LANE)
    tn = _pick_tn(n0, cap)
    n_run = _round_up(n0, tn)        # pad to a whole number of tiles -> no unspecified lanes
    return n_run, tn


def _to_fd(x, n_run):
    """(N, F) f32 -> padded, transposed (F_PAD, n_run) slab (zeros in all padding)."""
    N = x.shape[0]
    return jnp.zeros((F_PAD, n_run), jnp.float32).at[:FEATURE_DIMS, :N].set(x.T)


def _from_fd(x_fd, N):
    return x_fd[:FEATURE_DIMS, :N].T


def _cost(n, n_rhs):
    flops = 2 * n * (F_PAD * HIDDEN + HIDDEN * F_PAD) * n_rhs
    weight_bytes = 4 * (HIDDEN * (F_PAD + 2) + F_PAD * (HIDDEN + 1))
    bytes_accessed = 4 * 2 * n * F_PAD + weight_bytes
    return pl.CostEstimate(flops=flops, transcendentals=0, bytes_accessed=bytes_accessed)


# ---------------------------------------------------------------------------
# Layout-native entry points (state carried as the padded (F_PAD, n) slab)
# ---------------------------------------------------------------------------
def toy_ode_forward_fd(t, x_fd, params, *, cap=1024):
    """Single RHS eval on the lane-dense slab (F_PAD, n), n a multiple of 128.  Use this
    end-to-end inside a solver to avoid the pad/transpose HBM passes of toy_ode_forward."""
    n_run = x_fd.shape[1]
    tn = _pick_tn(n_run, cap)
    if n_run % tn:
        tn = _LANE                                            # always divides (n_run % 128 == 0)
    grid, in_specs, out_spec = _specs(n_run, tn)
    t_arr = jnp.reshape(jnp.asarray(t, dtype=jnp.float32), (1,))
    return pl.pallas_call(
        toy_ode_rhs_kernel,
        out_shape=jax.ShapeDtypeStruct((F_PAD, n_run), jnp.float32),
        grid=grid, in_specs=in_specs, out_specs=out_spec,
        compiler_params=pltpu.CompilerParams(dimension_semantics=("parallel",)),
        cost_estimate=_cost(n_run, 1),
    )(t_arr, x_fd, *params)


def toy_ode_euler_fd(t0, dt, n_steps, x_fd, params, *, cap=512):
    """Fused n_steps of explicit Euler on dx/dt = ToyODE(t, x); one pallas_call total.
    n_steps must be a static Python int (trip count of the fused in-kernel loop).
    cap=512 keeps h=(64,tn) f32 within ~32 vregs -> no spill traffic on the serial chain."""
    n_steps = int(n_steps)
    n_run = x_fd.shape[1]
    tn = _pick_tn(n_run, cap)
    if n_run % tn:
        tn = _LANE
    grid, in_specs, out_spec = _specs(n_run, tn)
    ts = jnp.stack([jnp.asarray(t0, jnp.float32), jnp.asarray(dt, jnp.float32)])
    unroll = max(1, min(8, n_steps))
    return pl.pallas_call(
        functools.partial(toy_ode_euler_kernel, n_steps, unroll),
        out_shape=jax.ShapeDtypeStruct((F_PAD, n_run), jnp.float32),
        grid=grid, in_specs=in_specs, out_specs=out_spec,
        compiler_params=pltpu.CompilerParams(dimension_semantics=("parallel",)),
        cost_estimate=_cost(n_run, n_steps),
    )(ts, x_fd, *params)


# ---------------------------------------------------------------------------
# (N, F) convenience wrappers (do the layout plumbing once)
# ---------------------------------------------------------------------------
def toy_ode_forward(t, x, params):
    """Single RHS evaluation (== ToyODE.forward).  x: (N, F) f32 -> (N, F) f32."""
    assert x.dtype == jnp.float32, "kernel is float32-only (v5e VPU/EUP lack bf16)"
    assert x.shape[1] == FEATURE_DIMS
    # TODO(synk): offer bf16 x/out I/O on v6e/v7x for this DMA-bound single-RHS path.
    N = x.shape[0]
    n_run, tn = _prep(N, cap=1024)
    out_fd = toy_ode_forward_fd(t, _to_fd(x, n_run), params, cap=tn)
    return _from_fd(out_fd, N)


def toy_ode_euler(t0, dt, n_steps, x, params):
    """Fused multi-step Euler; the single pad/unpad pass is amortized over n_steps RHS evals."""
    assert x.dtype == jnp.float32
    assert x.shape[1] == FEATURE_DIMS
    N = x.shape[0]
    n_run, tn = _prep(N, cap=512)
    out_fd = toy_ode_euler_fd(t0, dt, n_steps, _to_fd(x, n_run), params, cap=tn)
    return _from_fd(out_fd, N)


# ---------------------------------------------------------------------------
# Parameter init + pure-JAX reference
# ---------------------------------------------------------------------------
def init_params(key):
    """nn.Linear default init: U(-1/sqrt(fan_in), 1/sqrt(fan_in)); weights stored (out, in)."""
    k1, k2, k3, k4 = jax.random.split(key, 4)
    bound1 = 1.0 / jnp.sqrt(jnp.float32(IN_DIM))
    bound2 = 1.0 / jnp.sqrt(jnp.float32(HIDDEN))
    W1 = jax.random.uniform(k1, (HIDDEN, IN_DIM), jnp.float32, -bound1, bound1)
    b1 = jax.random.uniform(k2, (HIDDEN,), jnp.float32, -bound1, bound1)
    W2 = jax.random.uniform(k3, (FEATURE_DIMS, HIDDEN), jnp.float32, -bound2, bound2)
    b2 = jax.random.uniform(k4, (FEATURE_DIMS,), jnp.float32, -bound2, bound2)

    # Kernel layout: transposed, sublane-padded to 8.  Padding rows/cols are zero so padded
    # state rows stay exactly 0; W1 columns for the zero-augmentation are dropped entirely.
    w1x = jnp.zeros((HIDDEN, F_PAD), jnp.float32).at[:, :FEATURE_DIMS].set(W1[:, :FEATURE_DIMS])
    w1t = W1[:, FEATURE_DIMS].reshape(HIDDEN, 1)
    b1k = b1.reshape(HIDDEN, 1)
    w2 = jnp.zeros((F_PAD, HIDDEN), jnp.float32).at[:FEATURE_DIMS, :].set(W2)
    b2k = jnp.zeros((F_PAD, 1), jnp.float32).at[:FEATURE_DIMS, 0].set(b2)
    params = (w1x, w1t, b1k, w2, b2k)
    raw = (W1, b1, W2, b2)
    return params, raw


def reference_forward(t, x, raw_params):
    """Pure-JAX reference mirroring the PyTorch module exactly (concat-based)."""
    W1, b1, W2, b2 = raw_params
    N = x.shape[0]
    time = jnp.full((N, 1), t, dtype=jnp.float32)
    zeros = jnp.zeros((N, N_AUG), dtype=jnp.float32)
    aug = jnp.concatenate([x, time, zeros], axis=1)
    h = jnp.maximum(aug @ W1.T + b1, 0.0)
    return h @ W2.T + b2


if __name__ == "__main__":
    key = jax.random.PRNGKey(0)
    kp, kx, kx2 = jax.random.split(key, 3)
    params, raw_params = init_params(kp)

    N = 256  # points evolved by the ODE (2 lane tiles of 128)
    x = jax.random.normal(kx, (N, FEATURE_DIMS), dtype=jnp.float32)
    t = jnp.float32(0.5)

    # Single RHS evaluation (module forward).
    out = jax.block_until_ready(toy_ode_forward(t, x, params))
    ref = reference_forward(t, x, raw_params)
    assert out.shape == (N, FEATURE_DIMS)
    assert jnp.allclose(out, ref, atol=1e-5, rtol=1e-5), "RHS mismatch vs. pure-JAX reference"

    # Ragged batch (N not a multiple of 128) to exercise the zero-padded tile path.
    x_small = jax.random.normal(kx2, (100, FEATURE_DIMS), dtype=jnp.float32)
    out_small = jax.block_until_ready(toy_ode_forward(t, x_small, params))
    ref_small = reference_forward(t, x_small, raw_params)
    assert jnp.allclose(out_small, ref_small, atol=1e-5, rtol=1e-5), "ragged-N RHS mismatch"

    # Fused multi-step Euler integration: many RHS calls inside one pallas_call.
    t0, dt, n_steps = jnp.float32(0.0), jnp.float32(0.05), 16
    x_end = jax.block_until_ready(toy_ode_euler(t0, dt, n_steps, x, params))
    x_ref = x
    for i in range(n_steps):
        x_ref = x_ref + dt * reference_forward(t0 + dt * i, x_ref, raw_params)
    assert x_end.shape == (N, FEATURE_DIMS)
    assert jnp.allclose(x_end, x_ref, atol=1e-4, rtol=1e-4), "Euler mismatch vs. reference"

    # TODO(synk): alpha-noise branch (scales != None) and momentum_beta momentum state are
    # disabled by default in the module and are stateful/random; not implemented.
    print("KERNEL_OK")
</pallas_src>

<mosaic_0001>
module attributes {stable_mosaic.version = 11 : i64} {
  func.func @toy_ode_rhs_kernel(%arg0: i32, %arg1: memref<1xf32, #tpu.memory_space<smem>>, %arg2: memref<8x128xf32, #tpu.memory_space<vmem>>, %arg3: memref<64x8xf32, #tpu.memory_space<vmem>>, %arg4: memref<64x1xf32, #tpu.memory_space<vmem>>, %arg5: memref<64x1xf32, #tpu.memory_space<vmem>>, %arg6: memref<8x64xf32, #tpu.memory_space<vmem>>, %arg7: memref<8x1xf32, #tpu.memory_space<vmem>>, %arg8: memref<8x128xf32, #tpu.memory_space<vmem>>) attributes {dimension_semantics = [#tpu.dimension_semantics<parallel>], iteration_bounds = array<i64: 2>, scalar_prefetch = 0 : i64, scratch_operands = 0 : i64, tpu.core_type = #tpu.core_type<tc>, window_params = [{transform_indices = @transform_0, window_bounds = array<i64: 1>}, {transform_indices = @transform_1, window_bounds = array<i64: 8, 128>}, {pipeline_mode = #tpu.pipeline_mode<synchronous>, transform_indices = @transform_2, window_bounds = array<i64: 64, 8>}, {pipeline_mode = #tpu.pipeline_mode<synchronous>, transform_indices = @transform_3, window_bounds = array<i64: 64, 1>}, {pipeline_mode = #tpu.pipeline_mode<synchronous>, transform_indices = @transform_4, window_bounds = array<i64: 64, 1>}, {pipeline_mode = #tpu.pipeline_mode<synchronous>, transform_indices = @transform_5, window_bounds = array<i64: 8, 64>}, {pipeline_mode = #tpu.pipeline_mode<synchronous>, transform_indices = @transform_6, window_bounds = array<i64: 8, 1>}, {transform_indices = @transform_7, window_bounds = array<i64: 8, 128>}]} {
    %c0 = arith.constant 0 : index
    %0 = memref.load %arg1[%c0] : memref<1xf32, #tpu.memory_space<smem>>
    %c0_0 = arith.constant 0 : index
    %c0_1 = arith.constant 0 : index
    %1 = vector.load %arg4[%c0_0, %c0_1] : memref<64x1xf32, #tpu.memory_space<vmem>>, vector<64x1xf32>
    %2 = vector.broadcast %0 : f32 to vector<64x1xf32>
    %3 = arith.mulf %2, %1 : vector<64x1xf32>
    %c0_2 = arith.constant 0 : index
    %c0_3 = arith.constant 0 : index
    %4 = vector.load %arg5[%c0_2, %c0_3] : memref<64x1xf32, #tpu.memory_space<vmem>>, vector<64x1xf32>
    %5 = arith.addf %3, %4 : vector<64x1xf32>
    %c0_4 = arith.constant 0 : index
    %c0_5 = arith.constant 0 : index
    %6 = vector.load %arg3[%c0_4, %c0_5] : memref<64x8xf32, #tpu.memory_space<vmem>>, vector<64x8xf32>
    %c0_6 = arith.constant 0 : index
    %c0_7 = arith.constant 0 : index
    %7 = vector.load %arg2[%c0_6, %c0_7] : memref<8x128xf32, #tpu.memory_space<vmem>>, vector<8x128xf32>
    %cst = arith.constant dense<0.000000e+00> : vector<64x128xf32>
    %8 = tpu.matmul %6, %7, %cst {dimension_numbers = #tpu.dot_dimension_numbers<[1], [0], [0], [1], [0, 0, 1, 1], [], []>} : vector<64x8xf32>, vector<8x128xf32>, vector<64x128xf32> -> vector<64x128xf32>
    %9 = vector.broadcast %5 : vector<64x1xf32> to vector<64x128xf32>
    %10 = arith.addf %8, %9 : vector<64x128xf32>
    %cst_8 = arith.constant 0.000000e+00 : f32
    %11 = vector.broadcast %cst_8 : f32 to vector<64x128xf32>
    %12 = arith.maximumf %10, %11 : vector<64x128xf32>
    %c0_9 = arith.constant 0 : index
    %c0_10 = arith.constant 0 : index
    %13 = vector.load %arg6[%c0_9, %c0_10] : memref<8x64xf32, #tpu.memory_space<vmem>>, vector<8x64xf32>
    %cst_11 = arith.constant dense<0.000000e+00> : vector<8x128xf32>
    %14 = tpu.matmul %13, %12, %cst_11 {dimension_numbers = #tpu.dot_dimension_numbers<[1], [0], [0], [1], [0, 0, 1, 1], [], []>} : vector<8x64xf32>, vector<64x128xf32>, vector<8x128xf32> -> vector<8x128xf32>
    %c0_12 = arith.constant 0 : index
    %c0_13 = arith.constant 0 : index
    %15 = vector.load %arg7[%c0_12, %c0_13] : memref<8x1xf32, #tpu.memory_space<vmem>>, vector<8x1xf32>
    %16 = vector.broadcast %15 : vector<8x1xf32> to vector<8x128xf32>
    %17 = arith.addf %14, %16 : vector<8x128xf32>
    %c0_14 = arith.constant 0 : index
    %c0_15 = arith.constant 0 : index
    %18 = vector.load %arg8[%c0_14, %c0_15] : memref<8x128xf32, #tpu.memory_space<vmem>>, vector<8x128xf32>
    tpu.vector_store %arg8[%c0_14, %c0_15], %17 {strides = array<i32>} : memref<8x128xf32, #tpu.memory_space<vmem>>, vector<8x128xf32>,
    return
  }
  func.func @transform_0(%arg0: i32) -> i32 {
    %c0_i32 = arith.constant 0 : i32
    %c0_i32_0 = arith.constant 0 : i32
    return %c0_i32 : i32
  }
  func.func @transform_1(%arg0: i32) -> (i32, i32) {
    %c0_i32 = arith.constant 0 : i32
    %c0_i32_0 = arith.constant 0 : i32
    return %c0_i32, %arg0 : i32, i32
  }
  func.func @transform_2(%arg0: i32) -> (i32, i32) {
    %c0_i32 = arith.constant 0 : i32
    %c0_i32_0 = arith.constant 0 : i32
    %c0_i32_1 = arith.constant 0 : i32
    return %c0_i32, %c0_i32_0 : i32, i32
  }
  func.func @transform_3(%arg0: i32) -> (i32, i32) {
    %c0_i32 = arith.constant 0 : i32
    %c0_i32_0 = arith.constant 0 : i32
    %c0_i32_1 = arith.constant 0 : i32
    return %c0_i32, %c0_i32_0 : i32, i32
  }
  func.func @transform_4(%arg0: i32) -> (i32, i32) {
    %c0_i32 = arith.constant 0 : i32
    %c0_i32_0 = arith.constant 0 : i32
    %c0_i32_1 = arith.constant 0 : i32
    return %c0_i32, %c0_i32_0 : i32, i32
  }
  func.func @transform_5(%arg0: i32) -> (i32, i32) {
    %c0_i32 = arith.constant 0 : i32
    %c0_i32_0 = arith.constant 0 : i32
    %c0_i32_1 = arith.constant 0 : i32
    return %c0_i32, %c0_i32_0 : i32, i32
  }
  func.func @transform_6(%arg0: i32) -> (i32, i32) {
    %c0_i32 = arith.constant 0 : i32
    %c0_i32_0 = arith.constant 0 : i32
    %c0_i32_1 = arith.constant 0 : i32
    return %c0_i32, %c0_i32_0 : i32, i32
  }
  func.func @transform_7(%arg0: i32) -> (i32, i32) {
    %c0_i32 = arith.constant 0 : i32
    %c0_i32_0 = arith.constant 0 : i32
    return %c0_i32, %arg0 : i32, i32
  }
}

</mosaic_0001>

<llo_original>
// kernel: tpu_custom_call.1
$region0: #{tpu_custom_call.1}
  #allocation0 [shape = 'u32[]', space=smem, size = 0x4, offset = 0x4, fixed_abs, tag = 'smem constant byte address 0x4 - core index']
  #allocation1 [shape = 'u32[72,128]{1,0:T(1,128)}', space=vmem, size = 0x9000, scoped, tag = 'internal scratch']
  #allocation2 [shape = 'f32[1]{0:T(128)S(6)}', space=smem, size = 0x200, scoped, tag = 'scoped memory for tpu_custom_call.1']
  %s0 = inlined_call_operand.<no memory space> [shape: f32[1], index: 0, kind: input, shape index: {}]
  %s1 = inlined_call_operand.vmem [shape: f32[8,256], index: 1, kind: input, shape index: {}]
  %s2 = inlined_call_operand.vmem [shape: f32[64,8], index: 2, kind: input, shape index: {}]
  %s3 = inlined_call_operand.vmem [shape: f32[64,1], index: 3, kind: input, shape index: {}]
  %s4 = inlined_call_operand.vmem [shape: f32[64,1], index: 4, kind: input, shape index: {}]
  %s5 = inlined_call_operand.vmem [shape: f32[8,64], index: 5, kind: input, shape index: {}]
  %s6 = inlined_call_operand.vmem [shape: f32[8,1], index: 6, kind: input, shape index: {}]
  %s7 = inlined_call_operand.hbm [shape: f32[8,256], index: 7, kind: output, shape index: {}]
  %s8 = sld [smem:[#allocation0]]
  $region61: #{tpu_custom_call.1} parent=0
    _
  %s10 = ssub.s32 1, %s8
  %s11 = scalar_select 0, %s10, %s8
  %12 = sst [smem:[#allocation2]] %s0
  $region1: #{tpu_custom_call.1} parent=0
    #allocation3 [shape = 'u8[8192]{0}', space=vmem, size = 0x2000, scoped, tag = 'output window, operand 0']
    #allocation4 [shape = 's32[2]{0}', space=sflag, size = 0x8, scoped, tag = 'scoped memory for tpu_custom_call.1']
    %13 = vsyncpa [#allocation4], 0
    %s14 = scalar_lea.sflag [#allocation4], 1
    %15 = vsyncpa %s14, 0
    loop: start=0, step=1, limit=4
    $region2: #{tpu_custom_call.1} parent=1 // loop_pre_header
      _
    $region3: #{tpu_custom_call.1} parent=1 // loop_header
      %s17 = sphi 0, %s21
      %p18 = scmp.ge.s32.totalorder %s17, 4
      %s25 = sphi 0, %s25
      %s27 = sphi 0, %s25
      %s28 = sphi 0, %s27
      %s42 = sphi 0, %s28
      %s48 = sphi 0, %s50
      %s51 = sphi 0, %s48
      %s52 = sphi 0, %s51
      %s68 = sphi 0, %s52
      %s72 = sphi 0, %s72
      %s74 = sphi 0, %s72
      %s75 = sphi 0, %s74
      %s89 = sphi 0, %s75
      %s93 = sphi 0, %s93
      %s95 = sphi 0, %s93
      %s96 = sphi 0, %s95
      %s110 = sphi 0, %s96
      %s114 = sphi 0, %s114
      %s116 = sphi 0, %s114
      %s117 = sphi 0, %s116
      %s131 = sphi 0, %s117
      %s135 = sphi 0, %s135
      %s137 = sphi 0, %s135
      %s138 = sphi 0, %s137
      %s152 = sphi 0, %s138
      %s156 = sphi 0, %s156
      %s158 = sphi 0, %s156
      %s159 = sphi 0, %s158
      %s173 = sphi 0, %s159
      %s179 = sphi 0, %s181
      %s182 = sphi 0, %s179
      %s183 = sphi 0, %s182
      %s199 = sphi 0, %s183
    $region4: #{tpu_custom_call.1} parent=1 // loop_header_branch
      %20 = sbr.rel (%p18) target = $region8
    $region5: #{tpu_custom_call.1} parent=1 // loop_body
      %s22 = ssub.s32 %s17, 1
      %s23 = ssub.s32 %s17, 2
      %s24 = sadd.s32 %s17, 1
      %s26 = sadd.s32 %s25, 1
      %p29 = scmp.eq.s32.totalorder %s17, 1
      %p30 = scmp.ne.s32.totalorder %s25, %s27
      %p31 = scmp.eq.s32.totalorder %s17, 0
      %p32 = por %p30, %p31
      %p33 = scmp.ne.s32.totalorder %s25, %s27
      %p34 = scmp.eq.s32.totalorder %s22, 1
      %p35 = por %p33, %p34
      %p36 = scmp.ne.s32.totalorder %s27, %s28
      %p37 = scmp.eq.s32.totalorder %s22, 0
      %p38 = por %p36, %p37
      %p39 = scmp.ne.s32.totalorder %s27, %s28
      %p40 = scmp.eq.s32.totalorder %s23, 1
      %p41 = por %p39, %p40
      %p43 = scmp.ne.s32.totalorder %s28, %s42
      %p44 = scmp.eq.s32.totalorder %s23, 0
      %p45 = por %p43, %p44
      %s46 = ssub.s32 %s17, %s24
      %p47 = scmp.eq.s32.totalorder %s46, 0
      %s49 = sadd.s32 %s48, 1
      %s50 = scalar_select %p47, %s48, %s49
      %p53 = pneg %p47
      %p54 = scmp.eq.s32.totalorder %s17, 1
      %p55 = por %p53, %p54
      %p56 = scmp.ne.s32.totalorder %s48, %s51
      %p57 = scmp.eq.s32.totalorder %s17, 0
      %p58 = por %p56, %p57
      %p59 = scmp.ne.s32.totalorder %s48, %s51
      %p60 = scmp.eq.s32.totalorder %s22, 1
      %p61 = por %p59, %p60
      %p62 = scmp.ne.s32.totalorder %s51, %s52
      %p63 = scmp.eq.s32.totalorder %s22, 0
      %p64 = por %p62, %p63
      %p65 = scmp.ne.s32.totalorder %s51, %s52
      %p66 = scmp.eq.s32.totalorder %s23, 1
      %p67 = por %p65, %p66
      %p69 = scmp.ne.s32.totalorder %s52, %s68
      %p70 = scmp.eq.s32.totalorder %s23, 0
      %p71 = por %p69, %p70
      %s73 = sadd.s32 %s72, 1
      %p76 = scmp.eq.s32.totalorder %s17, 1
      %p77 = scmp.ne.s32.totalorder %s72, %s74
      %p78 = scmp.eq.s32.totalorder %s17, 0
      %p79 = por %p77, %p78
      %p80 = scmp.ne.s32.totalorder %s72, %s74
      %p81 = scmp.eq.s32.totalorder %s22, 1
      %p82 = por %p80, %p81
      %p83 = scmp.ne.s32.totalorder %s74, %s75
      %p84 = scmp.eq.s32.totalorder %s22, 0
      %p85 = por %p83, %p84
      %p86 = scmp.ne.s32.totalorder %s74, %s75
      %p87 = scmp.eq.s32.totalorder %s23, 1
      %p88 = por %p86, %p87
      %p90 = scmp.ne.s32.totalorder %s75, %s89
      %p91 = scmp.eq.s32.totalorder %s23, 0
      %p92 = por %p90, %p91
      %s94 = sadd.s32 %s93, 1
      %p97 = scmp.eq.s32.totalorder %s17, 1
      %p98 = scmp.ne.s32.totalorder %s93, %s95
      %p99 = scmp.eq.s32.totalorder %s17, 0
      %p100 = por %p98, %p99
      %p101 = scmp.ne.s32.totalorder %s93, %s95
      %p102 = scmp.eq.s32.totalorder %s22, 1
      %p103 = por %p101, %p102
      %p104 = scmp.ne.s32.totalorder %s95, %s96
      %p105 = scmp.eq.s32.totalorder %s22, 0
      %p106 = por %p104, %p105
      %p107 = scmp.ne.s32.totalorder %s95, %s96
      %p108 = scmp.eq.s32.totalorder %s23, 1
      %p109 = por %p107, %p108
      %p111 = scmp.ne.s32.totalorder %s96, %s110
      %p112 = scmp.eq.s32.totalorder %s23, 0
      %p113 = por %p111, %p112
      %s115 = sadd.s32 %s114, 1
      %p118 = scmp.eq.s32.totalorder %s17, 1
      %p119 = scmp.ne.s32.totalorder %s114, %s116
      %p120 = scmp.eq.s32.totalorder %s17, 0
      %p121 = por %p119, %p120
      %p122 = scmp.ne.s32.totalorder %s114, %s116
      %p123 = scmp.eq.s32.totalorder %s22, 1
      %p124 = por %p122, %p123
      %p125 = scmp.ne.s32.totalorder %s116, %s117
      %p126 = scmp.eq.s32.totalorder %s22, 0
      %p127 = por %p125, %p126
      %p128 = scmp.ne.s32.totalorder %s116, %s117
      %p129 = scmp.eq.s32.totalorder %s23, 1
      %p130 = por %p128, %p129
      %p132 = scmp.ne.s32.totalorder %s117, %s131
      %p133 = scmp.eq.s32.totalorder %s23, 0
      %p134 = por %p132, %p133
      %s136 = sadd.s32 %s135, 1
      %p139 = scmp.eq.s32.totalorder %s17, 1
      %p140 = scmp.ne.s32.totalorder %s135, %s137
      %p141 = scmp.eq.s32.totalorder %s17, 0
      %p142 = por %p140, %p141
      %p143 = scmp.ne.s32.totalorder %s135, %s137
      %p144 = scmp.eq.s32.totalorder %s22, 1
      %p145 = por %p143, %p144
      %p146 = scmp.ne.s32.totalorder %s137, %s138
      %p147 = scmp.eq.s32.totalorder %s22, 0
      %p148 = por %p146, %p147
      %p149 = scmp.ne.s32.totalorder %s137, %s138
      %p150 = scmp.eq.s32.totalorder %s23, 1
      %p151 = por %p149, %p150
      %p153 = scmp.ne.s32.totalorder %s138, %s152
      %p154 = scmp.eq.s32.totalorder %s23, 0
      %p155 = por %p153, %p154
      %s157 = sadd.s32 %s156, 1
      %p160 = scmp.eq.s32.totalorder %s17, 1
      %p161 = scmp.ne.s32.totalorder %s156, %s158
      %p162 = scmp.eq.s32.totalorder %s17, 0
      %p163 = por %p161, %p162
      %p164 = scmp.ne.s32.totalorder %s156, %s158
      %p165 = scmp.eq.s32.totalorder %s22, 1
      %p166 = por %p164, %p165
      %p167 = scmp.ne.s32.totalorder %s158, %s159
      %p168 = scmp.eq.s32.totalorder %s22, 0
      %p169 = por %p167, %p168
      %p170 = scmp.ne.s32.totalorder %s158, %s159
      %p171 = scmp.eq.s32.totalorder %s23, 1
      %p172 = por %p170, %p171
      %p174 = scmp.ne.s32.totalorder %s159, %s173
      %p175 = scmp.eq.s32.totalorder %s23, 0
      %p176 = por %p174, %p175
      %s177 = ssub.s32 %s17, %s24
      %p178 = scmp.eq.s32.totalorder %s177, 0
      %s180 = sadd.s32 %s179, 1
      %s181 = scalar_select %p178, %s179, %s180
      %p184 = pneg %p178
      %p185 = scmp.eq.s32.totalorder %s17, 1
      %p186 = por %p184, %p185
      %p187 = scmp.ne.s32.totalorder %s179, %s182
      %p188 = scmp.eq.s32.totalorder %s17, 0
      %p189 = por %p187, %p188
      %p190 = scmp.ne.s32.totalorder %s179, %s182
      %p191 = scmp.eq.s32.totalorder %s22, 1
      %p192 = por %p190, %p191
      %p193 = scmp.ne.s32.totalorder %s182, %s183
      %p194 = scmp.eq.s32.totalorder %s22, 0
      %p195 = por %p193, %p194
      %p196 = scmp.ne.s32.totalorder %s182, %s183
      %p197 = scmp.eq.s32.totalorder %s23, 1
      %p198 = por %p196, %p197
      %p200 = scmp.ne.s32.totalorder %s183, %s199
      %p201 = scmp.eq.s32.totalorder %s23, 0
      %p202 = por %p200, %p201
      %p203 = scmp.le.s32.totalorder 1, %s17
      %p204 = scmp.lt.s32.totalorder %s17, 3
      %p205 = pnand %p203, %p204
      %p206 = pneg %p205
      // Predicated region
      $region9: #{tpu_custom_call.1} parent=5 // pred_check
        _
      $region10: #{tpu_custom_call.1} parent=5 // pred_check_branch
        %208 = sbr.rel (%p205) target = $region12
      $region11: #{tpu_custom_call.1} parent=5 // pred_region
        %s209 = ssub.s32 %s17, 1
        // Predicated region
        $region13: #{tpu_custom_call.1} parent=11 // pred_check
          %p210 = pneg %p38
        $region14: #{tpu_custom_call.1} parent=11 // pred_check_branch
          %212 = sbr.rel (%p210) target = $region16
        $region15: #{tpu_custom_call.1} parent=11 // pred_region
          _
        $region16: #{tpu_custom_call.1} parent=11 // pred_fallthru
          _
        // Predicated region
        $region17: #{tpu_custom_call.1} parent=11 // pred_check
          %p213 = pneg %p85
        $region18: #{tpu_custom_call.1} parent=11 // pred_check_branch
          %215 = sbr.rel (%p213) target = $region20
        $region19: #{tpu_custom_call.1} parent=11 // pred_region
          _
        $region20: #{tpu_custom_call.1} parent=11 // pred_fallthru
          _
        // Predicated region
        $region21: #{tpu_custom_call.1} parent=11 // pred_check
          %p216 = pneg %p106
        $region22: #{tpu_custom_call.1} parent=11 // pred_check_branch
          %218 = sbr.rel (%p216) target = $region24
        $region23: #{tpu_custom_call.1} parent=11 // pred_region
          _
        $region24: #{tpu_custom_call.1} parent=11 // pred_fallthru
          _
        // Predicated region
        $region25: #{tpu_custom_call.1} parent=11 // pred_check
          %p219 = pneg %p127
        $region26: #{tpu_custom_call.1} parent=11 // pred_check_branch
          %221 = sbr.rel (%p219) target = $region28
        $region27: #{tpu_custom_call.1} parent=11 // pred_region
          _
        $region28: #{tpu_custom_call.1} parent=11 // pred_fallthru
          _
        // Predicated region
        $region29: #{tpu_custom_call.1} parent=11 // pred_check
          %p222 = pneg %p148
        $region30: #{tpu_custom_call.1} parent=11 // pred_check_branch
          %224 = sbr.rel (%p222) target = $region32
        $region31: #{tpu_custom_call.1} parent=11 // pred_region
          _
        $region32: #{tpu_custom_call.1} parent=11 // pred_fallthru
          _
        // Predicated region
        $region33: #{tpu_custom_call.1} parent=11 // pred_check
          %p225 = pneg %p169
        $region34: #{tpu_custom_call.1} parent=11 // pred_check_branch
          %227 = sbr.rel (%p225) target = $region36
        $region35: #{tpu_custom_call.1} parent=11 // pred_region
          _
        $region36: #{tpu_custom_call.1} parent=11 // pred_fallthru
          _
      $region12: #{tpu_custom_call.1} parent=5 // pred_fallthru
        _
      %p228 = scmp.lt.s32.totalorder %s17, 2
      // Predicated region
      $region37: #{tpu_custom_call.1} parent=5 // pred_check
        %p229 = pneg %p228
      $region38: #{tpu_custom_call.1} parent=5 // pred_check_branch
        %231 = sbr.rel (%p229) target = $region40
      $region39: #{tpu_custom_call.1} parent=5 // pred_region
        // Predicated region
        $region41: #{tpu_custom_call.1} parent=39 // pred_check
          %p232 = pneg %p58
        $region42: #{tpu_custom_call.1} parent=39 // pred_check_branch
          %234 = sbr.rel (%p232) target = $region44
        $region43: #{tpu_custom_call.1} parent=39 // pred_region
          %p235 = scmp.lt.s32.totalorder %s17, 1
          %s236 = scalar_select %p235, %s17, 1
          %s237 = smul.addr %s236, 8
          %s238 = scalar_lea.vmem %s1, %s237
        $region44: #{tpu_custom_call.1} parent=39 // pred_fallthru
          _
      $region40: #{tpu_custom_call.1} parent=5 // pred_fallthru
        _
      %p239 = scmp.le.s32.totalorder 1, %s17
      %p240 = scmp.lt.s32.totalorder %s17, 3
      %p241 = pnand %p239, %p240
      %p242 = pneg %p241
      // Predicated region
      $region45: #{tpu_custom_call.1} parent=5 // pred_check
        _
      $region46: #{tpu_custom_call.1} parent=5 // pred_check_branch
        %244 = sbr.rel (%p241) target = $region48
      $region47: #{tpu_custom_call.1} parent=5 // pred_region
        %s245 = ssub.s32 %s17, 1
        %p246 = pneg %p38
        %p247 = pneg %p35
        %p248 = scmp.lt.s32.totalorder %s22, 1
        %s249 = scalar_select %p248, %s22, 1
        %s250 = smul.addr %s249, 8
        %s251 = scalar_lea.vmem %s1, %s250
        %p252 = pneg %p64
        %p253 = pneg %p61
        %p254 = pneg %p85
        %p255 = pneg %p82
        %p256 = pneg %p106
        %p257 = pneg %p103
        %p258 = pneg %p127
        %p259 = pneg %p124
        %p260 = pneg %p148
        %p261 = pneg %p145
        %p262 = pneg %p169
        %p263 = pneg %p166
        %p264 = pneg %p195
        %p265 = pneg %p192
        %s266 = sand.u32 %s182, 1
        %s267 = scalar_lea.sflag [#allocation4], %s266
        %s268 = sand.u32 %s182, 1
        %s269 = smul.addr %s268, 8
        %s270 = scalar_lea.vmem [#allocation3], %s269
        %p271 = scmp.lt.s32.totalorder %s22, 1
        %s272 = scalar_select %p271, %s22, 1
        %s273 = smul.addr %s272, 8
        %s274 = scalar_lea.vmem %s1, %s273
        %s275 = sld [smem:[#allocation2]]
        %v276 = vld [vmem:[%s3] sm:$0xff]
        %v277 = vld [vmem:[%s3 + $0x8] sm:$0xff]
        %v278 = vld [vmem:[%s3 + $0x10] sm:$0xff]
        %v279 = vld [vmem:[%s3 + $0x18] sm:$0xff]
        %v280 = vld [vmem:[%s3 + $0x20] sm:$0xff]
        %v281 = vld [vmem:[%s3 + $0x28] sm:$0xff]
        %v282 = vld [vmem:[%s3 + $0x30] sm:$0xff]
        %v283 = vld [vmem:[%s3 + $0x38] sm:$0xff]
        %v284 = vstv %s275
        %v285 = vmul.f32 %v284, %v276
        %v286 = vmul.f32 %v284, %v277
        %v287 = vmul.f32 %v284, %v278
        %v288 = vmul.f32 %v284, %v279
        %v289 = vmul.f32 %v284, %v280
        %v290 = vmul.f32 %v284, %v281
        %v291 = vmul.f32 %v284, %v282
        %v292 = vmul.f32 %v284, %v283
        %v293 = vld [vmem:[%s4] sm:$0xff]
        %v294 = vld [vmem:[%s4 + $0x8] sm:$0xff]
        %v295 = vld [vmem:[%s4 + $0x10] sm:$0xff]
        %v296 = vld [vmem:[%s4 + $0x18] sm:$0xff]
        %v297 = vld [vmem:[%s4 + $0x20] sm:$0xff]
        %v298 = vld [vmem:[%s4 + $0x28] sm:$0xff]
        %v299 = vld [vmem:[%s4 + $0x30] sm:$0xff]
        %v300 = vld [vmem:[%s4 + $0x38] sm:$0xff]
        %v301 = vadd.f32 %v285, %v293
        %v302 = vadd.f32 %v286, %v294
        %v303 = vadd.f32 %v287, %v295
        %v304 = vadd.f32 %v288, %v296
        %v305 = vadd.f32 %v289, %v297
        %v306 = vadd.f32 %v290, %v298
        %v307 = vadd.f32 %v291, %v299
        %v308 = vadd.f32 %v292, %v300
        %v309 = vld [vmem:[%s2] sm:$0xff]
        %v310 = vld [vmem:[%s2 + $0x8] sm:$0xff]
        %v311 = vld [vmem:[%s2 + $0x10] sm:$0xff]
        %v312 = vld [vmem:[%s2 + $0x18] sm:$0xff]
        %v313 = vld [vmem:[%s2 + $0x20] sm:$0xff]
        %v314 = vld [vmem:[%s2 + $0x28] sm:$0xff]
        %v315 = vld [vmem:[%s2 + $0x30] sm:$0xff]
        %v316 = vld [vmem:[%s2 + $0x38] sm:$0xff]
        %v317 = vld [vmem:[%s274] sm:$0xff]
        %319 = vset.pattern.permute.xlu0 0
        %320 = vperm.xlu0 %319, %v301
        %v321 = vpop.permute.xlu0 %320
        %324 = vset.pattern.permute.xlu0 0
        %325 = vperm.xlu0 %324, %v302
        %v326 = vpop.permute.xlu0 %325
        %329 = vset.pattern.permute.xlu0 0
        %330 = vperm.xlu0 %329, %v303
        %v331 = vpop.permute.xlu0 %330
        %334 = vset.pattern.permute.xlu0 0
        %335 = vperm.xlu0 %334, %v304
        %v336 = vpop.permute.xlu0 %335
        %339 = vset.pattern.permute.xlu0 0
        %340 = vperm.xlu0 %339, %v305
        %v341 = vpop.permute.xlu0 %340
        %344 = vset.pattern.permute.xlu0 0
        %345 = vperm.xlu0 %344, %v306
        %v346 = vpop.permute.xlu0 %345
        %349 = vset.pattern.permute.xlu0 0
        %350 = vperm.xlu0 %349, %v307
        %v351 = vpop.permute.xlu0 %350
        %354 = vset.pattern.permute.xlu0 0
        %355 = vperm.xlu0 %354, %v308
        %v356 = vpop.permute.xlu0 %355
        %vm358 = vcmask 64512
        %v360 = vsel %vm358, %v309, 0
        %v363 = vsel %vm358, %v310, 0
        %v366 = vsel %vm358, %v311, 0
        %v369 = vsel %vm358, %v312, 0
        %v372 = vsel %vm358, %v313, 0
        %v375 = vsel %vm358, %v314, 0
        %v378 = vsel %vm358, %v315, 0
        %v381 = vsel %vm358, %v316, 0
        %383 = vmatpush.msra.mxu0 0.0
        %384 = vmatpush.msra.mxu0 0.0
        %385 = vmatpush.msra.mxu0 0.0
        %386 = vmatpush.msra.mxu0 0.0
        %387 = vmatpush.msra.mxu0 0.0
        %388 = vmatpush.msra.mxu0 0.0
        %389 = vmatpush.msra.mxu0 0.0
        %390 = vmatpush.msra.mxu0 0.0
        %391 = vmatpush.msra.mxu0 0.0
        %392 = vmatpush.msra.mxu0 0.0
        %393 = vmatpush.msra.mxu0 0.0
        %394 = vmatpush.msra.mxu0 0.0
        %395 = vmatpush.msra.mxu0 0.0
        %396 = vmatpush.msra.mxu0 0.0
        %397 = vmatpush.msra.mxu0 0.0
        %398 = vmatpush.msra.mxu0 %v317
        %399 = vmatmul.f32.gmra.mxu0 %v360
        %v400 = vpop.f32.mrf.mxu0
        %v401 = vadd.f32 %v321, %v400
        %402 = vmatmul.f32.gmra.mxu0 %v363
        %v403 = vpop.f32.mrf.mxu0
        %v404 = vadd.f32 %v326, %v403
        %405 = vmatmul.f32.gmra.mxu0 %v366
        %v406 = vpop.f32.mrf.mxu0
        %v407 = vadd.f32 %v331, %v406
        %408 = vmatmul.f32.gmra.mxu0 %v369
        %v409 = vpop.f32.mrf.mxu0
        %v410 = vadd.f32 %v336, %v409
        %411 = vmatmul.f32.gmra.mxu0 %v372
        %v412 = vpop.f32.mrf.mxu0
        %v413 = vadd.f32 %v341, %v412
        %414 = vmatmul.f32.gmra.mxu0 %v375
        %v415 = vpop.f32.mrf.mxu0
        %v416 = vadd.f32 %v346, %v415
        %417 = vmatmul.f32.gmra.mxu0 %v378
        %v418 = vpop.f32.mrf.mxu0
        %v419 = vadd.f32 %v351, %v418
        %420 = vmatmul.f32.gmra.mxu0 %v381
        %v421 = vpop.f32.mrf.mxu0
        %v422 = vadd.f32 %v356, %v421
        %423 = vdwg.mxu0
        %v424 = vmax.f32 %v401, 0.0
        %v425 = vmax.f32 %v404, 0.0
        %v426 = vmax.f32 %v407, 0.0
        %v427 = vmax.f32 %v410, 0.0
        %v428 = vmax.f32 %v413, 0.0
        %v429 = vmax.f32 %v416, 0.0
        %v430 = vmax.f32 %v419, 0.0
        %v431 = vmax.f32 %v422, 0.0
        %v432 = vld [vmem:[%s5] sm:$0xff]
        %v433 = vld [vmem:[%s6] sm:$0xff]
        %435 = vset.pattern.permute.xlu0 0
        %436 = vperm.xlu0 %435, %v433
        %v437 = vpop.permute.xlu0 %436
        %vm439 = vcmask 523264
        %v441 = vsel %vm439, %v432, 0
        %443 = vmatpush.msra.mxu0 0.0
        %444 = vmatpush.msra.mxu0 0.0
        %445 = vmatpush.msra.mxu0 0.0
        %446 = vmatpush.msra.mxu0 0.0
        %447 = vmatpush.msra.mxu0 0.0
        %448 = vmatpush.msra.mxu0 0.0
        %449 = vmatpush.msra.mxu0 0.0
        %450 = vmatpush.msra.mxu0 0.0
        %451 = vmatpush.msra.mxu0 %v431
        %452 = vmatpush.msra.mxu0 %v430
        %453 = vmatpush.msra.mxu0 %v429
        %454 = vmatpush.msra.mxu0 %v428
        %455 = vmatpush.msra.mxu0 %v427
        %456 = vmatpush.msra.mxu0 %v426
        %457 = vmatpush.msra.mxu0 %v425
        %458 = vmatpush.msra.mxu0 %v424
        %459 = vmatmul.f32.gmra.mxu0 %v441
        %v460 = vpop.f32.mrf.mxu0
        %v461 = vadd.f32 %v437, %v460
        %462 = vdwg.mxu0
        %463 = vst [vmem:[%s270] sm:$0xff] %v461
        %s464 = sand.u32 %s182, 1
        %s465 = scalar_lea.sflag [#allocation4], %s464
        %s466 = sand.u32 %s182, 1
        %s467 = smul.addr %s466, 8
        %s468 = scalar_lea.vmem [#allocation3], %s467
        // Predicated region
        $region49: #{tpu_custom_call.1} parent=47 // pred_check
          %p469 = pneg %p192
        $region50: #{tpu_custom_call.1} parent=47 // pred_check_branch
          %471 = sbr.rel (%p469) target = $region52
        $region51: #{tpu_custom_call.1} parent=47 // pred_region
          %473 = vsyncadd %s465, 0
          %s474 = smul.addr %s22, 8
          %s475 = scalar_lea.hbm %s7, %s474
          %s477 = sshll.u32 %s468, 4
          %s478 = int_to_ptr.vmem [resolvable:$true] %s477
          %s479 = sshll.u32 %s475, 4
          %s480 = int_to_ptr.hbm [resolvable:$true] %s479
          %482 = dma.vmem_to_hbm [thread:$0]  %s478, 128, %s480, %s465
        $region52: #{tpu_custom_call.1} parent=47 // pred_fallthru
          _
      $region48: #{tpu_custom_call.1} parent=5 // pred_fallthru
        _
      %p483 = scmp.le.s32.totalorder 2, %s17
      // Predicated region
      $region53: #{tpu_custom_call.1} parent=5 // pred_check
        %p484 = pneg %p483
      $region54: #{tpu_custom_call.1} parent=5 // pred_check_branch
        %486 = sbr.rel (%p484) target = $region56
      $region55: #{tpu_custom_call.1} parent=5 // pred_region
        %s487 = ssub.s32 %s17, 2
        // Predicated region
        $region57: #{tpu_custom_call.1} parent=55 // pred_check
          %p488 = pneg %p198
        $region58: #{tpu_custom_call.1} parent=55 // pred_check_branch
          %490 = sbr.rel (%p488) target = $region60
        $region59: #{tpu_custom_call.1} parent=55 // pred_region
          %s491 = sand.u32 %s183, 1
          %s492 = scalar_lea.sflag [#allocation4], %s491
          %s493 = sand.u32 %s183, 1
          %s494 = smul.addr %s493, 8
          %s495 = scalar_lea.vmem [#allocation3], %s494
          %497 = dma.done %s492, 128
        $region60: #{tpu_custom_call.1} parent=55 // pred_fallthru
          _
      $region56: #{tpu_custom_call.1} parent=5 // pred_fallthru
        _
    $region6: #{tpu_custom_call.1} parent=1 // loop_footer
      %s21 = sadd.s32 1, %s17
    $region7: #{tpu_custom_call.1} parent=1 // loop_footer_branch
      %16 = sbr.rel target = $region3
    $region8: #{tpu_custom_call.1} parent=1 // loop_exit
      _
    %498 = vsyncpa [#allocation4], 1
    %s499 = scalar_lea.sflag [#allocation4], 1
    %500 = vsyncpa %s499, 1

</llo_original>
